<compile_context>
chip_gen: v6e
topology: v6e:2x2x1
jax: 0.10.0
libtpu: 0.0.40
codegen_flags: <defaults>
</compile_context>

<pallas_src>
import functools

import jax
import jax.numpy as jnp
from jax.experimental import pallas as pl
from jax.experimental.pallas import tpu as pltpu

_LANES = 128
_SUBLANES = 8
_TILE_BYTES_CAP = 4 * 1024 * 1024     # per operand, per tile
_VMEM_LIMIT_BYTES = 32 * 1024 * 1024  # safe on v5e/v6e (128 MiB) and v7x (64 MiB)
_NCORES = 2                           # contiguous-half split for 2-TC chips


def _ordinal_loss_kernel(pred_ref, gt_ref, out_ref, acc_ref, *,
                         blk_rows, acc_rows, nblocks,
                         local_full_rows, rem_lanes, ragged):
    c = pl.program_id(0)          # core slice (parallel axis)
    j = pl.program_id(1)          # reduction step within the slice
    steps = pl.num_programs(1)
    blk = c * steps + j

    @pl.when(j == 0)
    def _():
        acc_ref[...] = jnp.zeros_like(acc_ref)

    def accumulate(mask_tail):
        p = jax.nn.sigmoid(pred_ref[...].astype(jnp.float32))
        g = gt_ref[...].astype(jnp.float32)
        d = p - g
        dd = d * d
        if mask_tail:
            # Boundary block only: row-level compare (+ lane compare on the
            # single ragged row).  All operands are small ints (< blk_rows,
            # < 128) -- no flat-index int32 overflow.
            row = jax.lax.broadcasted_iota(jnp.int32, (blk_rows, _LANES), 0)
            if rem_lanes == 0:
                mask = row < local_full_rows
            else:
                lane = jax.lax.broadcasted_iota(
                    jnp.int32, (blk_rows, _LANES), 1)
                mask = (row < local_full_rows) | (
                    (row == local_full_rows) & (lane < rem_lanes))
            dd = jnp.where(mask, dd, 0.0)
        # 8 independent accumulation chains (acc_rows=64 -> 8 vregs) for ILP.
        acc_ref[...] += jnp.sum(
            dd.reshape(blk_rows // acc_rows, acc_rows, _LANES), axis=0)

    if ragged:
        @pl.when(blk == nblocks - 1)
        def _():
            accumulate(mask_tail=True)

        @pl.when(blk < nblocks - 1)
        def _():
            accumulate(mask_tail=False)
    else:
        @pl.when(blk < nblocks)
        def _():
            accumulate(mask_tail=False)

    @pl.when(j == steps - 1)
    def _():
        out_ref[0, 0] = jnp.sum(acc_ref[...])


def ordinal_regression_loss(pred, gt):
    """Pallas implementation of OrdinalRegressionLoss.forward(pred, gt)."""
    assert pred.shape == gt.shape
    n, ch, h, w = pred.shape
    denom = n * h * w                      # mean over everything but channels
    total = n * ch * h * w

    # Flatten (free for contiguous arrays); keep native dtype, cast in-kernel.
    chunk = _LANES * _SUBLANES
    padded_total = -(-total // chunk) * chunk
    pred_flat = jnp.reshape(pred, (-1,))
    gt_flat = jnp.reshape(gt, (-1,))
    if padded_total != total:
        # Rare copy path (element count not a multiple of 1024); pad values
        # are irrelevant because the boundary block masks past `total`.
        pad = padded_total - total
        pred_flat = jnp.pad(pred_flat, (0, pad))
        gt_flat = jnp.pad(gt_flat, (0, pad))

    rows = padded_total // _LANES          # multiple of 8 by construction
    pred2d = jnp.reshape(pred_flat, (rows, _LANES))
    gt2d = jnp.reshape(gt_flat, (rows, _LANES))

    # Byte-based block cap (~4 MiB of the wider operand per tile).
    itemsize = max(jnp.dtype(pred.dtype).itemsize,
                   jnp.dtype(gt.dtype).itemsize)
    cap_rows = _TILE_BYTES_CAP // (_LANES * itemsize)
    cap_rows = max(64, (cap_rows // 64) * 64)
    blk_rows = min(cap_rows, rows)         # multiple of 8 either way

    nblocks = -(-rows // blk_rows)
    ncores = min(_NCORES, nblocks)         # no duplicate block for tiny inputs
    steps = -(-nblocks // ncores)
    grid = (ncores, steps)

    acc_rows = 64 if blk_rows % 64 == 0 else _SUBLANES

    # Boundary-block (static) mask parameters.
    full_rows = total // _LANES            # complete valid rows
    rem_lanes = total % _LANES             # valid lanes in the ragged row
    ragged = total != nblocks * blk_rows * _LANES
    local_full_rows = full_rows - (nblocks - 1) * blk_rows

    def in_map(c, j):
        # Clamp so an over-provisioned idle step never DMAs out of bounds;
        # its compute is skipped entirely inside the kernel.
        return (jnp.minimum(c * steps + j, nblocks - 1), 0)

    kernel = functools.partial(
        _ordinal_loss_kernel,
        blk_rows=blk_rows, acc_rows=acc_rows, nblocks=nblocks,
        local_full_rows=local_full_rows, rem_lanes=rem_lanes, ragged=ragged)

    bytes_in = total * (jnp.dtype(pred.dtype).itemsize
                        + jnp.dtype(gt.dtype).itemsize)
    cost = pl.CostEstimate(
        flops=4 * total,
        transcendentals=total,
        bytes_accessed=bytes_in + 4 * ncores,
    )

    partials = pl.pallas_call(
        kernel,
        out_shape=jax.ShapeDtypeStruct((ncores, 1), jnp.float32),
        grid_spec=pltpu.PrefetchScalarGridSpec(
            num_scalar_prefetch=0,
            grid=grid,
            in_specs=[
                pl.BlockSpec((blk_rows, _LANES), in_map),
                pl.BlockSpec((blk_rows, _LANES), in_map),
            ],
            out_specs=pl.BlockSpec(
                (1, 1), lambda c, j: (c, 0), memory_space=pltpu.SMEM),
            scratch_shapes=[pltpu.VMEM((acc_rows, _LANES), jnp.float32)],
        ),
        compiler_params=pltpu.CompilerParams(
            dimension_semantics=("parallel", "arbitrary"),
            vmem_limit_bytes=_VMEM_LIMIT_BYTES),
        cost_estimate=cost,
    )(pred2d, gt2d)

    return jnp.sum(partials) / jnp.float32(denom)


def _reference(pred, gt):
    p = jax.nn.sigmoid(pred.astype(jnp.float32))
    losses = jnp.sum((p - gt.astype(jnp.float32)) ** 2, axis=1)
    return jnp.mean(losses)


if __name__ == "__main__":
    key = jax.random.PRNGKey(0)
    k1, k2 = jax.random.split(key)
    # Small NCHW shapes consistent with the module's forward.
    pred = jax.random.normal(k1, (2, 4, 16, 16), dtype=jnp.float32)
    gt = jax.random.uniform(k2, (2, 4, 16, 16), dtype=jnp.float32)

    out = ordinal_regression_loss(pred, gt)
    out = jax.block_until_ready(out)

    ref = _reference(pred, gt)
    assert jnp.allclose(out, ref, rtol=1e-5, atol=1e-5), (out, ref)
    print("KERNEL_OK")
</pallas_src>

<mosaic_0001>
module attributes {stable_mosaic.version = 11 : i64} {
  func.func @_ordinal_loss_kernel(%arg0: i32, %arg1: i32, %arg2: memref<16x128xf32, #tpu.memory_space<vmem>>, %arg3: memref<16x128xf32, #tpu.memory_space<vmem>>, %arg4: memref<1x1xf32, #tpu.memory_space<smem>>, %arg5: memref<8x128xf32, #tpu.memory_space<vmem>>) attributes {dimension_semantics = [#tpu.dimension_semantics<parallel>, #tpu.dimension_semantics<arbitrary>], iteration_bounds = array<i64: 1, 1>, scalar_prefetch = 0 : i64, scratch_operands = 1 : i64, tpu.core_type = #tpu.core_type<tc>, window_params = [{transform_indices = @transform_0, window_bounds = array<i64: 16, 128>}, {transform_indices = @transform_1, window_bounds = array<i64: 16, 128>}, {transform_indices = @transform_2, window_bounds = array<i64: 1, 1>}]} {
    %c1_i32 = arith.constant 1 : i32
    %0 = arith.muli %arg0, %c1_i32 : i32
    %1 = arith.addi %0, %arg1 : i32
    %c0_i32 = arith.constant 0 : i32
    %2 = arith.cmpi eq, %arg1, %c0_i32 : i32
    %3 = arith.extui %2 : i1 to i32
    %c0_i32_0 = arith.constant 0 : i32
    %4 = arith.cmpi ne, %3, %c0_i32_0 : i32
    scf.if %4 {
      %cst = arith.constant 0.000000e+00 : f32
      %11 = vector.broadcast %cst : f32 to vector<8x128xf32>
      %c0 = arith.constant 0 : index
      %c0_5 = arith.constant 0 : index
      %12 = vector.load %arg5[%c0, %c0_5] : memref<8x128xf32, #tpu.memory_space<vmem>>, vector<8x128xf32>
      tpu.vector_store %arg5[%c0, %c0_5], %11 {strides = array<i32>} : memref<8x128xf32, #tpu.memory_space<vmem>>, vector<8x128xf32>,
    } else {
    }
    %c1_i32_1 = arith.constant 1 : i32
    %5 = arith.cmpi slt, %1, %c1_i32_1 : i32
    %6 = arith.extui %5 : i1 to i32
    %c0_i32_2 = arith.constant 0 : i32
    %7 = arith.cmpi ne, %6, %c0_i32_2 : i32
    scf.if %7 {
      %c0 = arith.constant 0 : index
      %c0_5 = arith.constant 0 : index
      %11 = vector.load %arg2[%c0, %c0_5] : memref<16x128xf32, #tpu.memory_space<vmem>>, vector<16x128xf32>
      %12 = arith.negf %11 : vector<16x128xf32>
      %13 = math.exp %12 : vector<16x128xf32>
      %cst = arith.constant 1.000000e+00 : f32
      %14 = vector.broadcast %cst : f32 to vector<16x128xf32>
      %15 = arith.addf %14, %13 : vector<16x128xf32>
      %16 = arith.divf %14, %15 : vector<16x128xf32>
      %c0_6 = arith.constant 0 : index
      %c0_7 = arith.constant 0 : index
      %17 = vector.load %arg3[%c0_6, %c0_7] : memref<16x128xf32, #tpu.memory_space<vmem>>, vector<16x128xf32>
      %18 = arith.subf %16, %17 : vector<16x128xf32>
      %19 = arith.mulf %18, %18 : vector<16x128xf32>
      %c0_8 = arith.constant 0 : index
      %c0_9 = arith.constant 0 : index
      %20 = vector.load %arg5[%c0_8, %c0_9] : memref<8x128xf32, #tpu.memory_space<vmem>>, vector<8x128xf32>
      %21 = vector.shape_cast %19 : vector<16x128xf32> to vector<2x8x128xf32>
      %cst_10 = arith.constant dense<0.000000e+00> : vector<8x128xf32>
      %22 = vector.multi_reduction <add>, %21, %cst_10 [0] : vector<2x8x128xf32> to vector<8x128xf32>
      %23 = arith.addf %20, %22 : vector<8x128xf32>
      %c0_11 = arith.constant 0 : index
      %c0_12 = arith.constant 0 : index
      %24 = vector.load %arg5[%c0_11, %c0_12] : memref<8x128xf32, #tpu.memory_space<vmem>>, vector<8x128xf32>
      tpu.vector_store %arg5[%c0_11, %c0_12], %23 {strides = array<i32>} : memref<8x128xf32, #tpu.memory_space<vmem>>, vector<8x128xf32>,
    } else {
    }
    %c0_i32_3 = arith.constant 0 : i32
    %8 = arith.cmpi eq, %arg1, %c0_i32_3 : i32
    %9 = arith.extui %8 : i1 to i32
    %c0_i32_4 = arith.constant 0 : i32
    %10 = arith.cmpi ne, %9, %c0_i32_4 : i32
    scf.if %10 {
      %c0 = arith.constant 0 : index
      %c0_5 = arith.constant 0 : index
      %11 = vector.load %arg5[%c0, %c0_5] : memref<8x128xf32, #tpu.memory_space<vmem>>, vector<8x128xf32>
      %12 = vector.shape_cast %11 : vector<8x128xf32> to vector<1x8x128xf32>
      %cst = arith.constant dense<0.000000e+00> : vector<1xf32>
      %13 = vector.multi_reduction <add>, %12, %cst [1, 2] : vector<1x8x128xf32> to vector<1xf32>
      %14 = vector.shape_cast %13 : vector<1xf32> to vector<1x1x1xf32>
      %15 = vector.extract %14[0, 0, 0] : f32 from vector<1x1x1xf32>
      %c0_6 = arith.constant 0 : index
      %c0_7 = arith.constant 0 : index
      %16 = memref.load %arg4[%c0_6, %c0_7] : memref<1x1xf32, #tpu.memory_space<smem>>
      memref.store %15, %arg4[%c0_6, %c0_7] : memref<1x1xf32, #tpu.memory_space<smem>>
    } else {
    }
    return
  }
  func.func @transform_0(%arg0: i32, %arg1: i32) -> (i32, i32) {
    %c1_i32 = arith.constant 1 : i32
    %0 = arith.muli %arg0, %c1_i32 : i32
    %1 = arith.addi %0, %arg1 : i32
    %c0_i32 = arith.constant 0 : i32
    %2 = arith.minsi %1, %c0_i32 : i32
    %c0_i32_0 = arith.constant 0 : i32
    %c0_i32_1 = arith.constant 0 : i32
    return %2, %c0_i32_0 : i32, i32
  }
  func.func @transform_1(%arg0: i32, %arg1: i32) -> (i32, i32) {
    %c1_i32 = arith.constant 1 : i32
    %0 = arith.muli %arg0, %c1_i32 : i32
    %1 = arith.addi %0, %arg1 : i32
    %c0_i32 = arith.constant 0 : i32
    %2 = arith.minsi %1, %c0_i32 : i32
    %c0_i32_0 = arith.constant 0 : i32
    %c0_i32_1 = arith.constant 0 : i32
    return %2, %c0_i32_0 : i32, i32
  }
  func.func @transform_2(%arg0: i32, %arg1: i32) -> (i32, i32) {
    %c0_i32 = arith.constant 0 : i32
    %c0_i32_0 = arith.constant 0 : i32
    return %arg0, %c0_i32 : i32, i32
  }
}

</mosaic_0001>

<llo_original>
// kernel: tpu_custom_call.1
$region0: #{tpu_custom_call.1}
  #allocation0 [shape = 'u32[]', space=smem, size = 0x4, offset = 0x4, fixed_abs, tag = 'smem constant byte address 0x4 - core index']
  #allocation1 [shape = 'u32[144,128]{1,0:T(1,128)}', space=vmem, size = 0x12000, scoped, tag = 'internal scratch']
  #allocation2 [shape = 'f32[8,128]{1,0:T(8,128)}', space=vmem, size = 0x1000, scoped, tag = 'scratch operand']
  %s0 = inlined_call_operand.hbm [shape: f32[16,128], index: 0, kind: input, shape index: {}]
  %s1 = inlined_call_operand.hbm [shape: f32[16,128], index: 1, kind: input, shape index: {}]
  %s2 = inlined_call_operand.hbm [shape: f32[1,1], index: 2, kind: output, shape index: {}]
  %s3 = sld [smem:[#allocation0]]
  $region38: #{tpu_custom_call.1} parent=0
    _
  %s5 = ssub.s32 1, %s3
  %s6 = scalar_select 0, %s5, %s3
  $region1: #{tpu_custom_call.1} parent=0
    #allocation3 [shape = 'u8[8192]{0}', space=vmem, size = 0x2000, scoped, tag = 'input window, operand 0, single buffered']
    #allocation4 [shape = 's32[1]{0}', space=sflag, size = 0x4, scoped, tag = 'scoped memory for tpu_custom_call.1']
    #allocation5 [shape = 's32[1]{0}', space=sflag, size = 0x4, scoped, tag = 'scoped memory for tpu_custom_call.1']
    #allocation6 [shape = 'u8[8192]{0}', space=vmem, size = 0x2000, scoped, tag = 'input window, operand 1, single buffered']
    #allocation7 [shape = 's32[1]{0}', space=sflag, size = 0x4, scoped, tag = 'scoped memory for tpu_custom_call.1']
    #allocation8 [shape = 'u8[512]{0}', space=smem, size = 0x200, scoped, tag = 'output window, operand 0, single buffered']
    %7 = vsyncpa [#allocation4], 0
    %8 = vsyncpa [#allocation7], 0
    %9 = vsyncpa [#allocation5], 0
    // Predicated region
    $region2: #{tpu_custom_call.1} parent=1 // pred_check
      _
    $region3: #{tpu_custom_call.1} parent=1 // pred_check_branch
      %11 = sbr.rel (0) target = $region5
    $region4: #{tpu_custom_call.1} parent=1 // pred_region
      %s12 = sadd.s32 0, 0
      %p13 = scmp.lt.s32.totalorder %s12, 0
      %s14 = scalar_select %p13, %s12, 0
      %s15 = smul.u32 2, %s14
      %s17 = ssub.s32 256, 256
      %18 = vsyncadd [#allocation4], %s17
      %s19 = smul.addr %s15, 128
      %s20 = scalar_lea.hbm %s0, %s19
      %s21 = sshll.u32 [#allocation3], 4
      %s22 = int_to_ptr.vmem [resolvable:$true] %s21
      %27 = dma.hbm_to_vmem [thread:$0]  %s20, 256, %s22, [#allocation4], 128, 128, 8
    $region5: #{tpu_custom_call.1} parent=1 // pred_fallthru
      _
    // Predicated region
    $region6: #{tpu_custom_call.1} parent=1 // pred_check
      _
    $region7: #{tpu_custom_call.1} parent=1 // pred_check_branch
      %29 = sbr.rel (0) target = $region9
    $region8: #{tpu_custom_call.1} parent=1 // pred_region
      %s30 = sadd.s32 0, 0
      %p31 = scmp.lt.s32.totalorder %s30, 0
      %s32 = scalar_select %p31, %s30, 0
      %s33 = smul.u32 2, %s32
      %s35 = ssub.s32 256, 256
      %36 = vsyncadd [#allocation7], %s35
      %s37 = smul.addr %s33, 128
      %s38 = scalar_lea.hbm %s1, %s37
      %s39 = sshll.u32 [#allocation6], 4
      %s40 = int_to_ptr.vmem [resolvable:$true] %s39
      %45 = dma.hbm_to_vmem [thread:$0]  %s38, 256, %s40, [#allocation7], 128, 128, 8
    $region9: #{tpu_custom_call.1} parent=1 // pred_fallthru
      _
    // Predicated region
    $region10: #{tpu_custom_call.1} parent=1 // pred_check
      _
    $region11: #{tpu_custom_call.1} parent=1 // pred_check_branch
      %47 = sbr.rel (0) target = $region13
    $region12: #{tpu_custom_call.1} parent=1 // pred_region
      %48 = dma.done [#allocation4], 256
    $region13: #{tpu_custom_call.1} parent=1 // pred_fallthru
      _
    // Predicated region
    $region14: #{tpu_custom_call.1} parent=1 // pred_check
      _
    $region15: #{tpu_custom_call.1} parent=1 // pred_check_branch
      %50 = sbr.rel (0) target = $region17
    $region16: #{tpu_custom_call.1} parent=1 // pred_region
      %51 = dma.done [#allocation7], 256
    $region17: #{tpu_custom_call.1} parent=1 // pred_fallthru
      _
    %s52 = sadd.s32 0, 0
    %p53 = scmp.lt.s32.totalorder %s52, 0
    %s54 = scalar_select %p53, %s52, 0
    %s55 = smul.u32 2, %s54
    %s56 = sadd.s32 0, 0
    %p57 = scmp.lt.s32.totalorder %s56, 0
    %s58 = scalar_select %p57, %s56, 0
    %s59 = smul.u32 2, %s58
    %s60 = sadd.s32 0, 0
    %p61 = scmp.eq.s32.totalorder 0, 0
    // Predicated region
    $region18: #{tpu_custom_call.1} parent=1 // pred_check
      %p62 = pneg %p61
    $region19: #{tpu_custom_call.1} parent=1 // pred_check_branch
      %64 = sbr.rel (%p62) target = $region21
    $region20: #{tpu_custom_call.1} parent=1 // pred_region
      %65 = vst [vmem:[#allocation2] sm:$0xff] 0.0
    $region21: #{tpu_custom_call.1} parent=1 // pred_fallthru
      _
    %p66 = scmp.lt.s32.totalorder %s60, 1
    // Predicated region
    $region22: #{tpu_custom_call.1} parent=1 // pred_check
      %p67 = pneg %p66
    $region23: #{tpu_custom_call.1} parent=1 // pred_check_branch
      %69 = sbr.rel (%p67) target = $region25
    $region24: #{tpu_custom_call.1} parent=1 // pred_region
      %v70 = vld [vmem:[#allocation3] sm:$0xff]
      %v71 = vld [vmem:[#allocation3 + $0x8] sm:$0xff]
      %v72 = vxor.u32 %v70, 2147483648
      %v73 = vxor.u32 %v71, 2147483648
      %v74 = vmul.f32 %v72, 1.442695
      %v75 = vpow.pop %v74
      %v76 = vmul.f32 %v73, 1.442695
      %v77 = vpow.pop %v76
      %v78 = vadd.f32 %v75, 1.0
      %v79 = vadd.f32 %v77, 1.0
      %v80 = vrcp.pop %v78
      %v81 = vmul.f32 1.0, %v80
      %v82 = vrcp.pop %v79
      %v83 = vmul.f32 1.0, %v82
      %v84 = vld [vmem:[#allocation6] sm:$0xff]
      %v85 = vld [vmem:[#allocation6 + $0x8] sm:$0xff]
      %v86 = vsub.f32 %v81, %v84
      %v87 = vsub.f32 %v83, %v85
      %v88 = vmul.f32 %v86, %v86
      %v89 = vmul.f32 %v87, %v87
      %v90 = vld [vmem:[#allocation2] sm:$0xff]
      %v91 = vadd.f32 %v88, %v89
      %v92 = vadd.f32 %v90, %v91
      %93 = vst [vmem:[#allocation2] sm:$0xff] %v92
    $region25: #{tpu_custom_call.1} parent=1 // pred_fallthru
      _
    // Predicated region
    $region26: #{tpu_custom_call.1} parent=1 // pred_check
      %p94 = pneg %p61
    $region27: #{tpu_custom_call.1} parent=1 // pred_check_branch
      %96 = sbr.rel (%p94) target = $region29
    $region28: #{tpu_custom_call.1} parent=1 // pred_region
      %v97 = vld [vmem:[#allocation2] sm:$0xff]
      %98 = vadd.xlane.f32.xlu0 %v97
      %v99 = vpop.xlane.xlu0 %98
      %v100 = vrot.slane %v99, 4
      %v101 = vadd.f32 %v99, %v100
      %v102 = vrot.slane %v101, 2
      %v103 = vadd.f32 %v101, %v102
      %v104 = vrot.slane %v103, 1
      %v105 = vadd.f32 %v103, %v104
      %s106 = vtos %v105
      %s107 = scalar_lea.smem [#allocation8], 0
      %108 = sst [smem:[%s107]] %s106
    $region29: #{tpu_custom_call.1} parent=1 // pred_fallthru
      _
    // Predicated region
    $region30: #{tpu_custom_call.1} parent=1 // pred_check
      _
    $region31: #{tpu_custom_call.1} parent=1 // pred_check_branch
      %110 = sbr.rel (0) target = $region33
    $region32: #{tpu_custom_call.1} parent=1 // pred_region
      %s112 = ssub.s32 16, 16
      %113 = vsyncadd [#allocation5], %s112
      %116 = dma.smem_to_hbm [#allocation8], 16, %s2, [#allocation5]
    $region33: #{tpu_custom_call.1} parent=1 // pred_fallthru
      _
    // Predicated region
    $region34: #{tpu_custom_call.1} parent=1 // pred_check
      _
    $region35: #{tpu_custom_call.1} parent=1 // pred_check_branch
      %118 = sbr.rel (0) target = $region37
    $region36: #{tpu_custom_call.1} parent=1 // pred_region
      %119 = dma.done [#allocation5], 16
    $region37: #{tpu_custom_call.1} parent=1 // pred_fallthru
      _
    %120 = sfence
    %121 = vsyncpa [#allocation4], 1
    %122 = vsyncpa [#allocation7], 1
    %123 = vsyncpa [#allocation5], 1

</llo_original>
